<compile_context>
chip_gen: v7x
topology: tpu7x:2x2x1
jax: 0.10.0
libtpu: 0.0.40
codegen_flags: <defaults>
</compile_context>

<pallas_src>
import jax
import jax.numpy as jnp
from jax.experimental import pallas as pl
from jax.experimental.pallas import tpu as pltpu


def _round_up(x, m):
    return ((x + m - 1) // m) * m


def _make_unigcn_kernel(n_layers, w_first_flags):
    """Build the fused multi-layer UniGCN kernel (layer loop statically unrolled)."""

    def kernel(b_ref, bt_ref, x0_ref, *rest):
        w_refs = rest[:n_layers]
        x0_out_ref, x1_out_ref = rest[n_layers:]

        f32 = jnp.float32
        bf16 = jnp.bfloat16

        b = b_ref[...]      # (Np, Ep)  bf16, exact {0,1}
        bt = bt_ref[...]    # (Ep, Np)  bf16, exact {0,1}

        # x_0 stays resident in VMEM (value carried across the unrolled layers);
        # kept in f32, cast to bf16 only at each MXU input.
        x0 = x0_ref[...].astype(f32)               # (Np, Cin0_pad)

        for l in range(n_layers):
            w = w_refs[l][...]                      # (Cin_pad_l, Hout_pad_l) bf16
            last = l == n_layers - 1
            if last:
                # x_1 is a module output on the last layer: materialise it.
                x1 = jnp.dot(bt, x0.astype(bf16),
                             preferred_element_type=f32)          # (Ep, Cin_pad)
                x1_out_ref[...] = x1.astype(x1_out_ref.dtype)
                xm = jnp.dot(x1.astype(bf16), w,
                             preferred_element_type=f32)          # (Ep, Hout_pad)
            elif w_first_flags[l]:
                # x_0' = B @ (B^T @ (x_0 @ W))  -- cheaper when E >> N
                y = jnp.dot(x0.astype(bf16), w,
                            preferred_element_type=f32)           # (Np, Hout_pad)
                xm = jnp.dot(bt, y.astype(bf16),
                             preferred_element_type=f32)          # (Ep, Hout_pad)
            else:
                # x_0' = B @ ((B^T @ x_0) @ W)
                x1 = jnp.dot(bt, x0.astype(bf16),
                             preferred_element_type=f32)          # (Ep, Cin_pad)
                xm = jnp.dot(x1.astype(bf16), w,
                             preferred_element_type=f32)          # (Ep, Hout_pad)
            x0 = jnp.dot(b, xm.astype(bf16),
                         preferred_element_type=f32)              # (Np, Hout_pad)

        x0_out_ref[...] = x0.astype(x0_out_ref.dtype)

    return kernel


def unigcn_forward(x_0, incidence_1, weights):
    """UniGCN forward (stack of UniGCNLayers) as one fused Pallas call.

    Returns (x_0, x_1) of the last layer, matching the PyTorch module.
    """
    n, e = incidence_1.shape
    c_in = x_0.shape[1]
    n_layers = len(weights)
    assert n_layers >= 1
    assert weights[0].shape[0] == c_in
    for l in range(n_layers - 1):
        assert weights[l + 1].shape[0] == weights[l].shape[1]

    f32, bf16 = jnp.float32, jnp.bfloat16

    # 128-padding on every axis: lane-dense (unmasked) loads/stores, MXU-aligned
    # tiles.  Padded regions are ZERO so contractions are unaffected, and the
    # zero-padding propagates correctly through every layer.
    n_p = _round_up(n, 128)
    e_p = _round_up(e, 128)
    cin_pads = [_round_up(w.shape[0], 128) for w in weights]
    hout_pads = [_round_up(w.shape[1], 128) for w in weights]

    # Binary incidence is exactly representable in bf16 (half the bytes, and the
    # MXU's native fast input dtype on every TPU generation).
    b_p = jnp.zeros((n_p, e_p), bf16).at[:n, :e].set(incidence_1.astype(bf16))
    bt_p = jnp.zeros((e_p, n_p), bf16).at[:e, :n].set(
        incidence_1.T.astype(bf16))            # transpose hoisted out of the kernel
    x0_p = jnp.zeros((n_p, cin_pads[0]), f32).at[:n, :c_in].set(x_0.astype(f32))
    w_ps = []
    for l, w in enumerate(weights):
        wp = jnp.zeros((cin_pads[l], hout_pads[l]), bf16)
        w_ps.append(wp.at[: w.shape[0], : w.shape[1]].set(w.astype(bf16)))

    # Static per-layer associativity choice (non-final layers only).
    w_first = []
    for l in range(n_layers):
        cp, hp = cin_pads[l], hout_pads[l]
        flops_a = e_p * n_p * cp + e_p * cp * hp      # (B^T x0) W
        flops_b = n_p * cp * hp + e_p * n_p * hp      # B^T (x0 W)
        w_first.append(bool(flops_b < flops_a))

    # Advisory cost estimate (actual padded MXU work / bytes moved).
    flops = 0
    for l in range(n_layers):
        cp, hp = cin_pads[l], hout_pads[l]
        if l == n_layers - 1 or not w_first[l]:
            flops += 2 * e_p * n_p * cp + 2 * e_p * cp * hp + 2 * n_p * e_p * hp
        else:
            flops += 2 * n_p * cp * hp + 2 * e_p * n_p * hp + 2 * n_p * e_p * hp
    in_bytes = (b_p.size + bt_p.size) * 2 + x0_p.size * 4 + sum(w.size * 2 for w in w_ps)
    out_bytes = n_p * hout_pads[-1] * 4 + e_p * cin_pads[-1] * 4
    bytes_accessed = in_bytes + out_bytes

    # Scoped-VMEM limit sized from the actual footprint (defaults are far below
    # physical VMEM and would cap graph size / force spills).
    max_w = max([cin_pads[0]] + hout_pads)
    tmp_bytes = 4 * max_w * (2 * n_p + 2 * e_p) + 2 * max_w * (n_p + e_p)
    vmem_limit = int(min(max(int((bytes_accessed + tmp_bytes) * 1.5), 16 * 2**20),
                         64 * 2**20))

    vmem_specs_in = [pl.BlockSpec(memory_space=pltpu.MemorySpace.VMEM)
                     for _ in range(3 + n_layers)]
    vmem_specs_out = (pl.BlockSpec(memory_space=pltpu.MemorySpace.VMEM),
                      pl.BlockSpec(memory_space=pltpu.MemorySpace.VMEM))

    x0_out, x1_out = pl.pallas_call(
        _make_unigcn_kernel(n_layers, tuple(w_first)),
        out_shape=(
            jax.ShapeDtypeStruct((n_p, hout_pads[-1]), x_0.dtype),  # node features
            jax.ShapeDtypeStruct((e_p, cin_pads[-1]), x_0.dtype),   # edge features
        ),
        in_specs=vmem_specs_in,
        out_specs=vmem_specs_out,
        compiler_params=pltpu.CompilerParams(vmem_limit_bytes=vmem_limit),
        cost_estimate=pl.CostEstimate(
            flops=int(flops), transcendentals=0, bytes_accessed=int(bytes_accessed)),
    )(b_p, bt_p, x0_p, *w_ps)

    return x0_out[:n, : weights[-1].shape[1]], x1_out[:e, : weights[-1].shape[0]]


def _xavier_uniform(key, shape, gain=1.414):
    fan_in, fan_out = shape
    bound = gain * jnp.sqrt(6.0 / (fan_in + fan_out))
    return jax.random.uniform(key, shape, jnp.float32, -bound, bound)


def _reference(x_0, incidence_1, weights):
    for w in weights:
        x_1 = incidence_1.T @ x_0
        x_0 = incidence_1 @ (x_1 @ w)
    return x_0, x_1


def _rel_err(a, b):
    a = a.astype(jnp.float32)
    b = b.astype(jnp.float32)
    return jnp.linalg.norm(a - b) / jnp.maximum(jnp.linalg.norm(b), 1e-30)


if __name__ == "__main__":
    # Small deterministic problem.
    n_nodes = 32
    n_edges = 16
    in_channels = 8
    hidden_channels = 32
    n_layers = 2

    key = jax.random.PRNGKey(0)
    k_x, k_b, k_w0, k_w1 = jax.random.split(key, 4)

    x_0 = jax.random.normal(k_x, (n_nodes, in_channels), jnp.float32)
    # Binary incidence matrix (n_nodes, n_edges).
    incidence_1 = jax.random.bernoulli(
        k_b, 0.3, (n_nodes, n_edges)).astype(jnp.float32)

    # Per-layer linear-transform weights (conv_level2_1_to_0.weight),
    # xavier_uniform with gain=1.414 as in the PyTorch module.
    weights = [
        _xavier_uniform(k_w0, (in_channels, hidden_channels)),
        _xavier_uniform(k_w1, (hidden_channels, hidden_channels)),
    ]
    assert len(weights) == n_layers

    x0_out, x1_out = unigcn_forward(x_0, incidence_1, weights)
    jax.block_until_ready((x0_out, x1_out))

    # Correctness check against pure-JAX f32 reference of the PyTorch semantics.
    # Matmul inputs are bf16 (f32 accumulation), so allow ~1e-2 relative drift.
    x0_ref, x1_ref = _reference(x_0, incidence_1, weights)
    assert x0_out.shape == (n_nodes, hidden_channels)
    assert x1_out.shape == (n_edges, hidden_channels)  # last-layer input channels == hidden
    assert float(_rel_err(x0_out, x0_ref)) < 3e-2
    assert float(_rel_err(x1_out, x1_ref)) < 3e-2

    print("KERNEL_OK")
</pallas_src>

<mosaic_0001>
module attributes {stable_mosaic.version = 11 : i64} {
  func.func @kernel(%arg0: memref<128x128xbf16, #tpu.memory_space<vmem>>, %arg1: memref<128x128xbf16, #tpu.memory_space<vmem>>, %arg2: memref<128x128xf32, #tpu.memory_space<vmem>>, %arg3: memref<128x128xbf16, #tpu.memory_space<vmem>>, %arg4: memref<128x128xbf16, #tpu.memory_space<vmem>>, %arg5: memref<128x128xf32, #tpu.memory_space<vmem>>, %arg6: memref<128x128xf32, #tpu.memory_space<vmem>>) attributes {dimension_semantics = [], scalar_prefetch = 0 : i64, scratch_operands = 0 : i64, tpu.core_type = #tpu.core_type<tc>} {
    %c0 = arith.constant 0 : index
    %c0_0 = arith.constant 0 : index
    %0 = vector.load %arg0[%c0, %c0_0] : memref<128x128xbf16, #tpu.memory_space<vmem>>, vector<128x128xbf16>
    %c0_1 = arith.constant 0 : index
    %c0_2 = arith.constant 0 : index
    %1 = vector.load %arg1[%c0_1, %c0_2] : memref<128x128xbf16, #tpu.memory_space<vmem>>, vector<128x128xbf16>
    %c0_3 = arith.constant 0 : index
    %c0_4 = arith.constant 0 : index
    %2 = vector.load %arg2[%c0_3, %c0_4] : memref<128x128xf32, #tpu.memory_space<vmem>>, vector<128x128xf32>
    %c0_5 = arith.constant 0 : index
    %c0_6 = arith.constant 0 : index
    %3 = vector.load %arg3[%c0_5, %c0_6] : memref<128x128xbf16, #tpu.memory_space<vmem>>, vector<128x128xbf16>
    %4 = arith.truncf %2 : vector<128x128xf32> to vector<128x128xbf16>
    %cst = arith.constant dense<0.000000e+00> : vector<128x128xf32>
    %5 = tpu.matmul %1, %4, %cst {dimension_numbers = #tpu.dot_dimension_numbers<[1], [0], [0], [1], [0, 0, 1, 1], [], []>} : vector<128x128xbf16>, vector<128x128xbf16>, vector<128x128xf32> -> vector<128x128xf32>
    %6 = arith.truncf %5 : vector<128x128xf32> to vector<128x128xbf16>
    %cst_7 = arith.constant dense<0.000000e+00> : vector<128x128xf32>
    %7 = tpu.matmul %6, %3, %cst_7 {dimension_numbers = #tpu.dot_dimension_numbers<[1], [0], [0], [1], [0, 0, 1, 1], [], []>} : vector<128x128xbf16>, vector<128x128xbf16>, vector<128x128xf32> -> vector<128x128xf32>
    %8 = arith.truncf %7 : vector<128x128xf32> to vector<128x128xbf16>
    %cst_8 = arith.constant dense<0.000000e+00> : vector<128x128xf32>
    %9 = tpu.matmul %0, %8, %cst_8 {dimension_numbers = #tpu.dot_dimension_numbers<[1], [0], [0], [1], [0, 0, 1, 1], [], []>} : vector<128x128xbf16>, vector<128x128xbf16>, vector<128x128xf32> -> vector<128x128xf32>
    %c0_9 = arith.constant 0 : index
    %c0_10 = arith.constant 0 : index
    %10 = vector.load %arg4[%c0_9, %c0_10] : memref<128x128xbf16, #tpu.memory_space<vmem>>, vector<128x128xbf16>
    %11 = arith.truncf %9 : vector<128x128xf32> to vector<128x128xbf16>
    %cst_11 = arith.constant dense<0.000000e+00> : vector<128x128xf32>
    %12 = tpu.matmul %1, %11, %cst_11 {dimension_numbers = #tpu.dot_dimension_numbers<[1], [0], [0], [1], [0, 0, 1, 1], [], []>} : vector<128x128xbf16>, vector<128x128xbf16>, vector<128x128xf32> -> vector<128x128xf32>
    %c0_12 = arith.constant 0 : index
    %c0_13 = arith.constant 0 : index
    %13 = vector.load %arg6[%c0_12, %c0_13] : memref<128x128xf32, #tpu.memory_space<vmem>>, vector<128x128xf32>
    tpu.vector_store %arg6[%c0_12, %c0_13], %12 {strides = array<i32>} : memref<128x128xf32, #tpu.memory_space<vmem>>, vector<128x128xf32>,
    %14 = arith.truncf %12 : vector<128x128xf32> to vector<128x128xbf16>
    %cst_14 = arith.constant dense<0.000000e+00> : vector<128x128xf32>
    %15 = tpu.matmul %14, %10, %cst_14 {dimension_numbers = #tpu.dot_dimension_numbers<[1], [0], [0], [1], [0, 0, 1, 1], [], []>} : vector<128x128xbf16>, vector<128x128xbf16>, vector<128x128xf32> -> vector<128x128xf32>
    %16 = arith.truncf %15 : vector<128x128xf32> to vector<128x128xbf16>
    %cst_15 = arith.constant dense<0.000000e+00> : vector<128x128xf32>
    %17 = tpu.matmul %0, %16, %cst_15 {dimension_numbers = #tpu.dot_dimension_numbers<[1], [0], [0], [1], [0, 0, 1, 1], [], []>} : vector<128x128xbf16>, vector<128x128xbf16>, vector<128x128xf32> -> vector<128x128xf32>
    %c0_16 = arith.constant 0 : index
    %c0_17 = arith.constant 0 : index
    %18 = vector.load %arg5[%c0_16, %c0_17] : memref<128x128xf32, #tpu.memory_space<vmem>>, vector<128x128xf32>
    tpu.vector_store %arg5[%c0_16, %c0_17], %17 {strides = array<i32>} : memref<128x128xf32, #tpu.memory_space<vmem>>, vector<128x128xf32>,
    return
  }
}

</mosaic_0001>

<llo_original>
// kernel: tpu_custom_call.1
$region0: #{tpu_custom_call.1}
  #allocation0 [shape = 'u32[]', space=smem, size = 0x4, offset = 0x4, fixed_abs, tag = 'smem constant byte address 0x4 - core index']
  #allocation1 [shape = 'u32[144,128]{1,0:T(1,128)}', space=vmem, size = 0x12000, scoped, tag = 'internal scratch']
  %s0 = inlined_call_operand.hbm [shape: bf16[128,128], index: 0, kind: input, shape index: {}]
  %s1 = inlined_call_operand.hbm [shape: bf16[128,128], index: 1, kind: input, shape index: {}]
  %s2 = inlined_call_operand.hbm [shape: f32[128,128], index: 2, kind: input, shape index: {}]
  %s3 = inlined_call_operand.hbm [shape: bf16[128,128], index: 3, kind: input, shape index: {}]
  %s4 = inlined_call_operand.hbm [shape: bf16[128,128], index: 4, kind: input, shape index: {}]
  %s5 = inlined_call_operand.hbm [shape: f32[128,128], index: 5, kind: output, shape index: {0}]
  %s6 = inlined_call_operand.hbm [shape: f32[128,128], index: 6, kind: output, shape index: {1}]
  %7 = xla_tuple %s5, %s6
  %s8 = sld [smem:[#allocation0]]
  $region58: #{tpu_custom_call.1} parent=0
    _
  %s10 = ssub.s32 1, %s8
  %s11 = scalar_select 0, %s10, %s8
  $region1: #{tpu_custom_call.1} parent=0
    #allocation2 [shape = 'u8[32768]{0}', space=vmem, size = 0x8000, scoped, tag = 'input window, operand 0, single buffered']
    #allocation3 [shape = 's32[1]{0}', space=sflag, size = 0x4, scoped, tag = 'scoped memory for tpu_custom_call.1']
    #allocation4 [shape = 's32[1]{0}', space=sflag, size = 0x4, scoped, tag = 'scoped memory for tpu_custom_call.1']
    #allocation5 [shape = 'u8[32768]{0}', space=vmem, size = 0x8000, scoped, tag = 'input window, operand 1, single buffered']
    #allocation6 [shape = 's32[1]{0}', space=sflag, size = 0x4, scoped, tag = 'scoped memory for tpu_custom_call.1']
    #allocation7 [shape = 'u8[65536]{0}', space=vmem, size = 0x10000, scoped, tag = 'input window, operand 2, single buffered']
    #allocation8 [shape = 'u8[32768]{0}', space=vmem, size = 0x8000, scoped, tag = 'input window, operand 3, single buffered']
    #allocation9 [shape = 's32[1]{0}', space=sflag, size = 0x4, scoped, tag = 'scoped memory for tpu_custom_call.1']
    #allocation10 [shape = 'u8[32768]{0}', space=vmem, size = 0x8000, scoped, tag = 'input window, operand 4, single buffered']
    #allocation11 [shape = 'u8[65536]{0}', space=vmem, size = 0x10000, scoped, tag = 'output window, operand 0, single buffered']
    #allocation12 [shape = 'u8[65536]{0}', space=vmem, size = 0x10000, scoped, tag = 'output window, operand 1, single buffered']
    #allocation13 [shape = 's32[1]{0}', space=sflag, size = 0x4, scoped, tag = 'scoped memory for tpu_custom_call.1']
    %12 = vsyncpa [#allocation3], 0
    %13 = vsyncpa [#allocation6], 0
    %14 = vsyncpa [#allocation9], 0
    %15 = vsyncpa [#allocation4], 0
    %16 = vsyncpa [#allocation13], 0
    // Predicated region
    $region2: #{tpu_custom_call.1} parent=1 // pred_check
      _
    $region3: #{tpu_custom_call.1} parent=1 // pred_check_branch
      %18 = sbr.rel (0) target = $region5
    $region4: #{tpu_custom_call.1} parent=1 // pred_region
      %s20 = ssub.s32 1024, 1024
      %21 = vsyncadd [#allocation3], %s20
      %s22 = sshll.u32 [#allocation2], 4
      %s23 = int_to_ptr.vmem [resolvable:$true] %s22
      %28 = dma.hbm_to_vmem [thread:$0]  %s0, 1024, %s23, [#allocation3], 64, 64, 4
    $region5: #{tpu_custom_call.1} parent=1 // pred_fallthru
      _
    // Predicated region
    $region6: #{tpu_custom_call.1} parent=1 // pred_check
      _
    $region7: #{tpu_custom_call.1} parent=1 // pred_check_branch
      %30 = sbr.rel (0) target = $region9
    $region8: #{tpu_custom_call.1} parent=1 // pred_region
      %s32 = ssub.s32 1024, 1024
      %33 = vsyncadd [#allocation6], %s32
      %s34 = sshll.u32 [#allocation5], 4
      %s35 = int_to_ptr.vmem [resolvable:$true] %s34
      %40 = dma.hbm_to_vmem [thread:$0]  %s1, 1024, %s35, [#allocation6], 64, 64, 4
    $region9: #{tpu_custom_call.1} parent=1 // pred_fallthru
      _
    // Predicated region
    $region10: #{tpu_custom_call.1} parent=1 // pred_check
      _
    $region11: #{tpu_custom_call.1} parent=1 // pred_check_branch
      %42 = sbr.rel (0) target = $region13
    $region12: #{tpu_custom_call.1} parent=1 // pred_region
      %s44 = ssub.s32 2048, 2048
      %45 = vsyncadd [#allocation6], %s44
      %s46 = sshll.u32 [#allocation7], 4
      %s47 = int_to_ptr.vmem [resolvable:$true] %s46
      %52 = dma.hbm_to_vmem [thread:$0]  %s2, 2048, %s47, [#allocation6], 128, 128, 8
    $region13: #{tpu_custom_call.1} parent=1 // pred_fallthru
      _
    // Predicated region
    $region14: #{tpu_custom_call.1} parent=1 // pred_check
      _
    $region15: #{tpu_custom_call.1} parent=1 // pred_check_branch
      %54 = sbr.rel (0) target = $region17
    $region16: #{tpu_custom_call.1} parent=1 // pred_region
      %s56 = ssub.s32 1024, 1024
      %57 = vsyncadd [#allocation9], %s56
      %s58 = sshll.u32 [#allocation8], 4
      %s59 = int_to_ptr.vmem [resolvable:$true] %s58
      %64 = dma.hbm_to_vmem [thread:$0]  %s3, 1024, %s59, [#allocation9], 64, 64, 4
    $region17: #{tpu_custom_call.1} parent=1 // pred_fallthru
      _
    // Predicated region
    $region18: #{tpu_custom_call.1} parent=1 // pred_check
      _
    $region19: #{tpu_custom_call.1} parent=1 // pred_check_branch
      %66 = sbr.rel (0) target = $region21
    $region20: #{tpu_custom_call.1} parent=1 // pred_region
      %s68 = ssub.s32 1024, 1024
      %69 = vsyncadd [#allocation9], %s68
      %s70 = sshll.u32 [#allocation10], 4
      %s71 = int_to_ptr.vmem [resolvable:$true] %s70
      %76 = dma.hbm_to_vmem [thread:$0]  %s4, 1024, %s71, [#allocation9], 64, 64, 4
    $region21: #{tpu_custom_call.1} parent=1 // pred_fallthru
      _
    // Predicated region
    $region22: #{tpu_custom_call.1} parent=1 // pred_check
      _
    $region23: #{tpu_custom_call.1} parent=1 // pred_check_branch
      %78 = sbr.rel (0) target = $region25
    $region24: #{tpu_custom_call.1} parent=1 // pred_region
      %79 = dma.done [#allocation3], 1024
    $region25: #{tpu_custom_call.1} parent=1 // pred_fallthru
      _
    // Predicated region
    $region26: #{tpu_custom_call.1} parent=1 // pred_check
      _
    $region27: #{tpu_custom_call.1} parent=1 // pred_check_branch
      %81 = sbr.rel (0) target = $region29
    $region28: #{tpu_custom_call.1} parent=1 // pred_region
      %82 = dma.done [#allocation6], 1024
    $region29: #{tpu_custom_call.1} parent=1 // pred_fallthru
      _
    // Predicated region
    $region30: #{tpu_custom_call.1} parent=1 // pred_check
      _
    $region31: #{tpu_custom_call.1} parent=1 // pred_check_branch
      %84 = sbr.rel (0) target = $region33
    $region32: #{tpu_custom_call.1} parent=1 // pred_region
      %85 = dma.done [#allocation6], 2048
    $region33: #{tpu_custom_call.1} parent=1 // pred_fallthru
      _
    // Predicated region
    $region34: #{tpu_custom_call.1} parent=1 // pred_check
      _
    $region35: #{tpu_custom_call.1} parent=1 // pred_check_branch
      %87 = sbr.rel (0) target = $region37
    $region36: #{tpu_custom_call.1} parent=1 // pred_region
      %88 = dma.done [#allocation9], 1024
    $region37: #{tpu_custom_call.1} parent=1 // pred_fallthru
      _
    // Predicated region
    $region38: #{tpu_custom_call.1} parent=1 // pred_check
      _
    $region39: #{tpu_custom_call.1} parent=1 // pred_check_branch
      %90 = sbr.rel (0) target = $region41
    $region40: #{tpu_custom_call.1} parent=1 // pred_region
      %91 = dma.done [#allocation9], 1024
    $region41: #{tpu_custom_call.1} parent=1 // pred_fallthru
      _
    %v93 = vld [vmem:[#allocation2] sm:$0xf]
    %v94 = vld [vmem:[#allocation2 + $0x4] sm:$0xf]
    %v95 = vld [vmem:[#allocation2 + $0x8] sm:$0xf]
    %v96 = vld [vmem:[#allocation2 + $0xc] sm:$0xf]
    %v97 = vld [vmem:[#allocation2 + $0x10] sm:$0xf]
    %v98 = vld [vmem:[#allocation2 + $0x14] sm:$0xf]
    %v99 = vld [vmem:[#allocation2 + $0x18] sm:$0xf]
    %v100 = vld [vmem:[#allocation2 + $0x1c] sm:$0xf]
    %v101 = vld [vmem:[#allocation2 + $0x20] sm:$0xf]
    %v102 = vld [vmem:[#allocation2 + $0x24] sm:$0xf]
    %v103 = vld [vmem:[#allocation2 + $0x28] sm:$0xf]
    %v104 = vld [vmem:[#allocation2 + $0x2c] sm:$0xf]
    %v105 = vld [vmem:[#allocation2 + $0x30] sm:$0xf]
    %v106 = vld [vmem:[#allocation2 + $0x34] sm:$0xf]
    %v107 = vld [vmem:[#allocation2 + $0x38] sm:$0xf]
    %v108 = vld [vmem:[#allocation2 + $0x3c] sm:$0xf]
    %v109 = vld [vmem:[#allocation5] sm:$0xf]
    %v110 = vld [vmem:[#allocation5 + $0x4] sm:$0xf]
    %v111 = vld [vmem:[#allocation5 + $0x8] sm:$0xf]
    %v112 = vld [vmem:[#allocation5 + $0xc] sm:$0xf]
    %v113 = vld [vmem:[#allocation5 + $0x10] sm:$0xf]
    %v114 = vld [vmem:[#allocation5 + $0x14] sm:$0xf]
    %v115 = vld [vmem:[#allocation5 + $0x18] sm:$0xf]
    %v116 = vld [vmem:[#allocation5 + $0x1c] sm:$0xf]
    %v117 = vld [vmem:[#allocation5 + $0x20] sm:$0xf]
    %v118 = vld [vmem:[#allocation5 + $0x24] sm:$0xf]
    %v119 = vld [vmem:[#allocation5 + $0x28] sm:$0xf]
    %v120 = vld [vmem:[#allocation5 + $0x2c] sm:$0xf]
    %v121 = vld [vmem:[#allocation5 + $0x30] sm:$0xf]
    %v122 = vld [vmem:[#allocation5 + $0x34] sm:$0xf]
    %v123 = vld [vmem:[#allocation5 + $0x38] sm:$0xf]
    %v124 = vld [vmem:[#allocation5 + $0x3c] sm:$0xf]
    %v125 = vld [vmem:[#allocation7] sm:$0xff]
    %v126 = vld [vmem:[#allocation7 + $0x8] sm:$0xff]
    %v127 = vld [vmem:[#allocation7 + $0x10] sm:$0xff]
    %v128 = vld [vmem:[#allocation7 + $0x18] sm:$0xff]
    %v129 = vld [vmem:[#allocation7 + $0x20] sm:$0xff]
    %v130 = vld [vmem:[#allocation7 + $0x28] sm:$0xff]
    %v131 = vld [vmem:[#allocation7 + $0x30] sm:$0xff]
    %v132 = vld [vmem:[#allocation7 + $0x38] sm:$0xff]
    %v133 = vld [vmem:[#allocation7 + $0x40] sm:$0xff]
    %v134 = vld [vmem:[#allocation7 + $0x48] sm:$0xff]
    %v135 = vld [vmem:[#allocation7 + $0x50] sm:$0xff]
    %v136 = vld [vmem:[#allocation7 + $0x58] sm:$0xff]
    %v137 = vld [vmem:[#allocation7 + $0x60] sm:$0xff]
    %v138 = vld [vmem:[#allocation7 + $0x68] sm:$0xff]
    %v139 = vld [vmem:[#allocation7 + $0x70] sm:$0xff]
    %v140 = vld [vmem:[#allocation7 + $0x78] sm:$0xff]
    %v141 = vld [vmem:[#allocation8] sm:$0xf]
    %v142 = vld [vmem:[#allocation8 + $0x4] sm:$0xf]
    %v143 = vld [vmem:[#allocation8 + $0x8] sm:$0xf]
    %v144 = vld [vmem:[#allocation8 + $0xc] sm:$0xf]
    %v145 = vld [vmem:[#allocation8 + $0x10] sm:$0xf]
    %v146 = vld [vmem:[#allocation8 + $0x14] sm:$0xf]
    %v147 = vld [vmem:[#allocation8 + $0x18] sm:$0xf]
    %v148 = vld [vmem:[#allocation8 + $0x1c] sm:$0xf]
    %v149 = vld [vmem:[#allocation8 + $0x20] sm:$0xf]
    %v150 = vld [vmem:[#allocation8 + $0x24] sm:$0xf]
    %v151 = vld [vmem:[#allocation8 + $0x28] sm:$0xf]
    %v152 = vld [vmem:[#allocation8 + $0x2c] sm:$0xf]
    %v153 = vld [vmem:[#allocation8 + $0x30] sm:$0xf]
    %v154 = vld [vmem:[#allocation8 + $0x34] sm:$0xf]
    %v155 = vld [vmem:[#allocation8 + $0x38] sm:$0xf]
    %v156 = vld [vmem:[#allocation8 + $0x3c] sm:$0xf]
    %v157 = vpack.c.bf16 %v126, %v125
    %v158 = vpack.c.bf16 %v128, %v127
    %v159 = vpack.c.bf16 %v130, %v129
    %v160 = vpack.c.bf16 %v132, %v131
    %v161 = vpack.c.bf16 %v134, %v133
    %v162 = vpack.c.bf16 %v136, %v135
    %v163 = vpack.c.bf16 %v138, %v137
    %v164 = vpack.c.bf16 %v140, %v139
    %v181 = vunpack.c.l.b16 %v109
    %v182 = vunpack.c.l.b16 %v110
    %v183 = vunpack.c.l.b16 %v111
    %v184 = vunpack.c.l.b16 %v112
    %v185 = vunpack.c.l.b16 %v113
    %v186 = vunpack.c.l.b16 %v114
    %v187 = vunpack.c.l.b16 %v115
    %v188 = vunpack.c.l.b16 %v116
    %v189 = vunpack.c.l.b16 %v117
    %v190 = vunpack.c.l.b16 %v118
    %v191 = vunpack.c.l.b16 %v119
    %v192 = vunpack.c.l.b16 %v120
    %v193 = vunpack.c.l.b16 %v121
    %v194 = vunpack.c.l.b16 %v122
    %v195 = vunpack.c.l.b16 %v123
    %v196 = vunpack.c.l.b16 %v124
    %v197 = vpack.c.b16 %v182, %v181
    %v198 = vpack.c.b16 %v184, %v183
    %v199 = vpack.c.b16 %v186, %v185
    %v200 = vpack.c.b16 %v188, %v187
    %v201 = vpack.c.b16 %v190, %v189
    %v202 = vpack.c.b16 %v192, %v191
    %v203 = vpack.c.b16 %v194, %v193
    %v204 = vpack.c.b16 %v196, %v195
    %213 = vmatprep.subr.bf16.mxu0 0
    %214 = vmatpush1.bf16.msra.mxu0 %v157
    %215 = vmatprep.subr.bf16.mxu0 0
    %216 = vmatpush1.bf16.msra.mxu0 %v158
    %217 = vmatprep.subr.bf16.mxu0 0
    %218 = vmatpush1.bf16.msra.mxu0 %v159
    %219 = vmatprep.subr.bf16.mxu0 0
    %220 = vmatpush1.bf16.msra.mxu0 %v160
    %221 = vmatprep.subr.bf16.mxu0 0
    %222 = vmatpush1.bf16.msra.mxu0 %v161
    %223 = vmatprep.subr.bf16.mxu0 0
    %224 = vmatpush1.bf16.msra.mxu0 %v162
    %225 = vmatprep.subr.bf16.mxu0 0
    %226 = vmatpush1.bf16.msra.mxu0 %v163
    %227 = vmatprep.subr.bf16.mxu0 0
    %228 = vmatpush1.bf16.msra.mxu0 %v164
    %229 = vmatprep.subr.bf16.mxu0 0
    %230 = vmatpush1.bf16.msra.mxu0 0
    %231 = vmatprep.subr.bf16.mxu0 0
    %232 = vmatpush1.bf16.msra.mxu0 0
    %233 = vmatprep.subr.bf16.mxu0 0
    %234 = vmatpush1.bf16.msra.mxu0 0
    %235 = vmatprep.subr.bf16.mxu0 0
    %236 = vmatpush1.bf16.msra.mxu0 0
    %237 = vmatprep.subr.bf16.mxu0 0
    %238 = vmatpush1.bf16.msra.mxu0 0
    %239 = vmatprep.subr.bf16.mxu0 0
    %240 = vmatpush1.bf16.msra.mxu0 0
    %241 = vmatprep.subr.bf16.mxu0 0
    %242 = vmatpush1.bf16.msra.mxu0 0
    %243 = vmatprep.subr.bf16.mxu0 0
    %244 = vmatpush1.bf16.msra.mxu0 0
    %245 = vmatprep.mubr.bf16.mxu0 0
    %246 = vmatmul.mubr.bf16.gmra.mrb[0].mxu0 %v197
    %v247 = vpop.f32.mrb[0].mxu0
    %v248 = vadd.f32 0.0, %v247
    %v249 = vpop.f32.mrb[0].mxu0
    %v250 = vpop.f32.mrb[0].mxu0
    %v251 = vadd.f32 0.0, %v250
    %v252 = vpop.f32.mrb[0].mxu0
    %253 = vmatprep.mubr.bf16.mxu0 0
    %254 = vmatmul.mubr.bf16.gmra.mrb[0].mxu0 %v198
    %v255 = vpop.f32.mrb[0].mxu0
    %v256 = vadd.f32 0.0, %v255
    %v257 = vpop.f32.mrb[0].mxu0
    %v258 = vpop.f32.mrb[0].mxu0
    %v259 = vadd.f32 0.0, %v258
    %v260 = vpop.f32.mrb[0].mxu0
    %261 = vmatprep.mubr.bf16.mxu0 0
    %262 = vmatmul.mubr.bf16.gmra.mrb[0].mxu0 %v199
    %v263 = vpop.f32.mrb[0].mxu0
    %v264 = vadd.f32 0.0, %v263
    %v265 = vpop.f32.mrb[0].mxu0
    %v266 = vpop.f32.mrb[0].mxu0
    %v267 = vadd.f32 0.0, %v266
    %v268 = vpop.f32.mrb[0].mxu0
    %269 = vmatprep.mubr.bf16.mxu0 0
    %270 = vmatmul.mubr.bf16.gmra.mrb[0].mxu0 %v200
    %v271 = vpop.f32.mrb[0].mxu0
    %v272 = vadd.f32 0.0, %v271
    %v273 = vpop.f32.mrb[0].mxu0
    %v274 = vpop.f32.mrb[0].mxu0
    %v275 = vadd.f32 0.0, %v274
    %v276 = vpop.f32.mrb[0].mxu0
    %277 = vmatprep.mubr.bf16.mxu0 0
    %278 = vmatmul.mubr.bf16.gmra.mrb[0].mxu0 %v201
    %v279 = vpop.f32.mrb[0].mxu0
    %v280 = vadd.f32 0.0, %v279
    %v281 = vpop.f32.mrb[0].mxu0
    %v282 = vpop.f32.mrb[0].mxu0
    %v283 = vadd.f32 0.0, %v282
    %v284 = vpop.f32.mrb[0].mxu0
    %285 = vmatprep.mubr.bf16.mxu0 0
    %286 = vmatmul.mubr.bf16.gmra.mrb[0].mxu0 %v202
    %v287 = vpop.f32.mrb[0].mxu0
    %v288 = vadd.f32 0.0, %v287
    %v289 = vpop.f32.mrb[0].mxu0
    %v290 = vpop.f32.mrb[0].mxu0
    %v291 = vadd.f32 0.0, %v290
    %v292 = vpop.f32.mrb[0].mxu0
    %293 = vmatprep.mubr.bf16.mxu0 0
    %294 = vmatmul.mubr.bf16.gmra.mrb[0].mxu0 %v203
    %v295 = vpop.f32.mrb[0].mxu0
    %v296 = vadd.f32 0.0, %v295
    %v297 = vpop.f32.mrb[0].mxu0
    %v298 = vpop.f32.mrb[0].mxu0
    %v299 = vadd.f32 0.0, %v298
    %v300 = vpop.f32.mrb[0].mxu0
    %301 = vmatprep.mubr.bf16.mxu0 0
    %302 = vmatmul.mubr.bf16.gmra.mrb[0].mxu0 %v204
    %v303 = vpop.f32.mrb[0].mxu0
    %v304 = vadd.f32 0.0, %v303
    %v305 = vpop.f32.mrb[0].mxu0
    %v306 = vpop.f32.mrb[0].mxu0
    %v307 = vadd.f32 0.0, %v306
    %v308 = vpop.f32.mrb[0].mxu0
    %309 = vdwg.mxu0
    %v310 = vpack.c.bf16 %v251, %v248
    %v311 = vpack.c.bf16 %v259, %v256
    %v312 = vpack.c.bf16 %v267, %v264
    %v313 = vpack.c.bf16 %v275, %v272
    %v314 = vpack.c.bf16 %v283, %v280
    %v315 = vpack.c.bf16 %v291, %v288
    %v316 = vpack.c.bf16 %v299, %v296
    %v317 = vpack.c.bf16 %v307, %v304
    %v334 = vunpack.c.l.b16 %v141
    %v335 = vunpack.c.l.b16 %v142
    %v336 = vunpack.c.l.b16 %v143
    %v337 = vunpack.c.l.b16 %v144
    %v338 = vunpack.c.l.b16 %v145
    %v339 = vunpack.c.l.b16 %v146
    %v340 = vunpack.c.l.b16 %v147
    %v341 = vunpack.c.l.b16 %v148
    %v342 = vunpack.c.l.b16 %v149
    %v343 = vunpack.c.l.b16 %v150
    %v344 = vunpack.c.l.b16 %v151
    %v345 = vunpack.c.l.b16 %v152
    %v346 = vunpack.c.l.b16 %v153
    %v347 = vunpack.c.l.b16 %v154
    %v348 = vunpack.c.l.b16 %v155
    %v349 = vunpack.c.l.b16 %v156
    %v350 = vpack.c.b16 %v335, %v334
    %v351 = vpack.c.b16 %v337, %v336
    %v352 = vpack.c.b16 %v339, %v338
    %v353 = vpack.c.b16 %v341, %v340
    %v354 = vpack.c.b16 %v343, %v342
    %v355 = vpack.c.b16 %v345, %v344
    %v356 = vpack.c.b16 %v347, %v346
    %v357 = vpack.c.b16 %v349, %v348
    %366 = vmatprep.subr.bf16.mxu0 0
    %367 = vmatpush1.bf16.msra.mxu0 %v350
    %368 = vmatprep.subr.bf16.mxu0 0
    %369 = vmatpush1.bf16.msra.mxu0 %v351
    %370 = vmatprep.subr.bf16.mxu0 0
    %371 = vmatpush1.bf16.msra.mxu0 %v352
    %372 = vmatprep.subr.bf16.mxu0 0
    %373 = vmatpush1.bf16.msra.mxu0 %v353
    %374 = vmatprep.subr.bf16.mxu0 0
    %375 = vmatpush1.bf16.msra.mxu0 %v354
    %376 = vmatprep.subr.bf16.mxu0 0
    %377 = vmatpush1.bf16.msra.mxu0 %v355
    %378 = vmatprep.subr.bf16.mxu0 0
    %379 = vmatpush1.bf16.msra.mxu0 %v356
    %380 = vmatprep.subr.bf16.mxu0 0
    %381 = vmatpush1.bf16.msra.mxu0 %v357
    %382 = vmatprep.subr.bf16.mxu0 0
    %383 = vmatpush1.bf16.msra.mxu0 0
    %384 = vmatprep.subr.bf16.mxu0 0
    %385 = vmatpush1.bf16.msra.mxu0 0
    %386 = vmatprep.subr.bf16.mxu0 0
    %387 = vmatpush1.bf16.msra.mxu0 0
    %388 = vmatprep.subr.bf16.mxu0 0
    %389 = vmatpush1.bf16.msra.mxu0 0
    %390 = vmatprep.subr.bf16.mxu0 0
    %391 = vmatpush1.bf16.msra.mxu0 0
    %392 = vmatprep.subr.bf16.mxu0 0
    %393 = vmatpush1.bf16.msra.mxu0 0
    %394 = vmatprep.subr.bf16.mxu0 0
    %395 = vmatpush1.bf16.msra.mxu0 0
    %396 = vmatprep.subr.bf16.mxu0 0
    %397 = vmatpush1.bf16.msra.mxu0 0
    %398 = vmatprep.mubr.bf16.mxu0 0
    %399 = vmatmul.mubr.bf16.gmra.mrb[0].mxu0 %v310
    %v400 = vpop.f32.mrb[0].mxu0
    %v401 = vadd.f32 0.0, %v400
    %v402 = vpop.f32.mrb[0].mxu0
    %v403 = vpop.f32.mrb[0].mxu0
    %v404 = vadd.f32 0.0, %v403
    %v405 = vpop.f32.mrb[0].mxu0
    %406 = vmatprep.mubr.bf16.mxu0 0
    %407 = vmatmul.mubr.bf16.gmra.mrb[0].mxu0 %v311
    %v408 = vpop.f32.mrb[0].mxu0
    %v409 = vadd.f32 0.0, %v408
    %v410 = vpop.f32.mrb[0].mxu0
    %v411 = vpop.f32.mrb[0].mxu0
    %v412 = vadd.f32 0.0, %v411
    %v413 = vpop.f32.mrb[0].mxu0
    %414 = vmatprep.mubr.bf16.mxu0 0
    %415 = vmatmul.mubr.bf16.gmra.mrb[0].mxu0 %v312
    %v416 = vpop.f32.mrb[0].mxu0
    %v417 = vadd.f32 0.0, %v416
    %v418 = vpop.f32.mrb[0].mxu0
    %v419 = vpop.f32.mrb[0].mxu0
    %v420 = vadd.f32 0.0, %v419
    %v421 = vpop.f32.mrb[0].mxu0
    %422 = vmatprep.mubr.bf16.mxu0 0
    %423 = vmatmul.mubr.bf16.gmra.mrb[0].mxu0 %v313
    %v424 = vpop.f32.mrb[0].mxu0
    %v425 = vadd.f32 0.0, %v424
    %v426 = vpop.f32.mrb[0].mxu0
    %v427 = vpop.f32.mrb[0].mxu0
    %v428 = vadd.f32 0.0, %v427
    %v429 = vpop.f32.mrb[0].mxu0
    %430 = vmatprep.mubr.bf16.mxu0 0
    %431 = vmatmul.mubr.bf16.gmra.mrb[0].mxu0 %v314
    %v432 = vpop.f32.mrb[0].mxu0
    %v433 = vadd.f32 0.0, %v432
    %v434 = vpop.f32.mrb[0].mxu0
    %v435 = vpop.f32.mrb[0].mxu0
    %v436 = vadd.f32 0.0, %v435
    %v437 = vpop.f32.mrb[0].mxu0
    %438 = vmatprep.mubr.bf16.mxu0 0
    %439 = vmatmul.mubr.bf16.gmra.mrb[0].mxu0 %v315
    %v440 = vpop.f32.mrb[0].mxu0
    %v441 = vadd.f32 0.0, %v440
    %v442 = vpop.f32.mrb[0].mxu0
    %v443 = vpop.f32.mrb[0].mxu0
    %v444 = vadd.f32 0.0, %v443
    %v445 = vpop.f32.mrb[0].mxu0
    %446 = vmatprep.mubr.bf16.mxu0 0
    %447 = vmatmul.mubr.bf16.gmra.mrb[0].mxu0 %v316
    %v448 = vpop.f32.mrb[0].mxu0
    %v449 = vadd.f32 0.0, %v448
    %v450 = vpop.f32.mrb[0].mxu0
    %v451 = vpop.f32.mrb[0].mxu0
    %v452 = vadd.f32 0.0, %v451
    %v453 = vpop.f32.mrb[0].mxu0
    %454 = vmatprep.mubr.bf16.mxu0 0
    %455 = vmatmul.mubr.bf16.gmra.mrb[0].mxu0 %v317
    %v456 = vpop.f32.mrb[0].mxu0
    %v457 = vadd.f32 0.0, %v456
    %v458 = vpop.f32.mrb[0].mxu0
    %v459 = vpop.f32.mrb[0].mxu0
    %v460 = vadd.f32 0.0, %v459
    %v461 = vpop.f32.mrb[0].mxu0
    %462 = vdwg.mxu0
    %v463 = vpack.c.bf16 %v404, %v401
    %v464 = vpack.c.bf16 %v412, %v409
    %v465 = vpack.c.bf16 %v420, %v417
    %v466 = vpack.c.bf16 %v428, %v425
    %v467 = vpack.c.bf16 %v436, %v433
    %v468 = vpack.c.bf16 %v444, %v441
    %v469 = vpack.c.bf16 %v452, %v449
    %v470 = vpack.c.bf16 %v460, %v457
    %v487 = vunpack.c.l.b16 %v93
    %v488 = vunpack.c.l.b16 %v94
    %v489 = vunpack.c.l.b16 %v95
    %v490 = vunpack.c.l.b16 %v96
    %v491 = vunpack.c.l.b16 %v97
    %v492 = vunpack.c.l.b16 %v98
    %v493 = vunpack.c.l.b16 %v99
    %v494 = vunpack.c.l.b16 %v100
    %v495 = vunpack.c.l.b16 %v101
    %v496 = vunpack.c.l.b16 %v102
    %v497 = vunpack.c.l.b16 %v103
    %v498 = vunpack.c.l.b16 %v104
    %v499 = vunpack.c.l.b16 %v105
    %v500 = vunpack.c.l.b16 %v106
    %v501 = vunpack.c.l.b16 %v107
    %v502 = vunpack.c.l.b16 %v108
    %v503 = vpack.c.b16 %v488, %v487
    %v504 = vpack.c.b16 %v490, %v489
    %v505 = vpack.c.b16 %v492, %v491
    %v506 = vpack.c.b16 %v494, %v493
    %v507 = vpack.c.b16 %v496, %v495
    %v508 = vpack.c.b16 %v498, %v497
    %v509 = vpack.c.b16 %v500, %v499
    %v510 = vpack.c.b16 %v502, %v501
    %519 = vmatprep.subr.bf16.mxu0 0
    %520 = vmatpush1.bf16.msra.mxu0 %v463
    %521 = vmatprep.subr.bf16.mxu0 0
    %522 = vmatpush1.bf16.msra.mxu0 %v464
    %523 = vmatprep.subr.bf16.mxu0 0
    %524 = vmatpush1.bf16.msra.mxu0 %v465
    %525 = vmatprep.subr.bf16.mxu0 0
    %526 = vmatpush1.bf16.msra.mxu0 %v466
    %527 = vmatprep.subr.bf16.mxu0 0
    %528 = vmatpush1.bf16.msra.mxu0 %v467
    %529 = vmatprep.subr.bf16.mxu0 0
    %530 = vmatpush1.bf16.msra.mxu0 %v468
    %531 = vmatprep.subr.bf16.mxu0 0
    %532 = vmatpush1.bf16.msra.mxu0 %v469
    %533 = vmatprep.subr.bf16.mxu0 0
    %534 = vmatpush1.bf16.msra.mxu0 %v470
    %535 = vmatprep.subr.bf16.mxu0 0
    %536 = vmatpush1.bf16.msra.mxu0 0
    %537 = vmatprep.subr.bf16.mxu0 0
    %538 = vmatpush1.bf16.msra.mxu0 0
    %539 = vmatprep.subr.bf16.mxu0 0
    %540 = vmatpush1.bf16.msra.mxu0 0
    %541 = vmatprep.subr.bf16.mxu0 0
    %542 = vmatpush1.bf16.msra.mxu0 0
    %543 = vmatprep.subr.bf16.mxu0 0
    %544 = vmatpush1.bf16.msra.mxu0 0
    %545 = vmatprep.subr.bf16.mxu0 0
    %546 = vmatpush1.bf16.msra.mxu0 0
    %547 = vmatprep.subr.bf16.mxu0 0
    %548 = vmatpush1.bf16.msra.mxu0 0
    %549 = vmatprep.subr.bf16.mxu0 0
    %550 = vmatpush1.bf16.msra.mxu0 0
    %551 = vmatprep.mubr.bf16.mxu0 0
    %552 = vmatmul.mubr.bf16.gmra.mrb[0].mxu0 %v503
    %v553 = vpop.f32.mrb[0].mxu0
    %v554 = vadd.f32 0.0, %v553
    %v555 = vpop.f32.mrb[0].mxu0
    %v556 = vpop.f32.mrb[0].mxu0
    %v557 = vadd.f32 0.0, %v556
    %v558 = vpop.f32.mrb[0].mxu0
    %559 = vmatprep.mubr.bf16.mxu0 0
    %560 = vmatmul.mubr.bf16.gmra.mrb[0].mxu0 %v504
    %v561 = vpop.f32.mrb[0].mxu0
    %v562 = vadd.f32 0.0, %v561
    %v563 = vpop.f32.mrb[0].mxu0
    %v564 = vpop.f32.mrb[0].mxu0
    %v565 = vadd.f32 0.0, %v564
    %v566 = vpop.f32.mrb[0].mxu0
    %567 = vmatprep.mubr.bf16.mxu0 0
    %568 = vmatmul.mubr.bf16.gmra.mrb[0].mxu0 %v505
    %v569 = vpop.f32.mrb[0].mxu0
    %v570 = vadd.f32 0.0, %v569
    %v571 = vpop.f32.mrb[0].mxu0
    %v572 = vpop.f32.mrb[0].mxu0
    %v573 = vadd.f32 0.0, %v572
    %v574 = vpop.f32.mrb[0].mxu0
    %575 = vmatprep.mubr.bf16.mxu0 0
    %576 = vmatmul.mubr.bf16.gmra.mrb[0].mxu0 %v506
    %v577 = vpop.f32.mrb[0].mxu0
    %v578 = vadd.f32 0.0, %v577
    %v579 = vpop.f32.mrb[0].mxu0
    %v580 = vpop.f32.mrb[0].mxu0
    %v581 = vadd.f32 0.0, %v580
    %v582 = vpop.f32.mrb[0].mxu0
    %583 = vmatprep.mubr.bf16.mxu0 0
    %584 = vmatmul.mubr.bf16.gmra.mrb[0].mxu0 %v507
    %v585 = vpop.f32.mrb[0].mxu0
    %v586 = vadd.f32 0.0, %v585
    %v587 = vpop.f32.mrb[0].mxu0
    %v588 = vpop.f32.mrb[0].mxu0
    %v589 = vadd.f32 0.0, %v588
    %v590 = vpop.f32.mrb[0].mxu0
    %591 = vmatprep.mubr.bf16.mxu0 0
    %592 = vmatmul.mubr.bf16.gmra.mrb[0].mxu0 %v508
    %v593 = vpop.f32.mrb[0].mxu0
    %v594 = vadd.f32 0.0, %v593
    %v595 = vpop.f32.mrb[0].mxu0
    %v596 = vpop.f32.mrb[0].mxu0
    %v597 = vadd.f32 0.0, %v596
    %v598 = vpop.f32.mrb[0].mxu0
    %599 = vmatprep.mubr.bf16.mxu0 0
    %600 = vmatmul.mubr.bf16.gmra.mrb[0].mxu0 %v509
    %v601 = vpop.f32.mrb[0].mxu0
    %v602 = vadd.f32 0.0, %v601
    %v603 = vpop.f32.mrb[0].mxu0
    %v604 = vpop.f32.mrb[0].mxu0
    %v605 = vadd.f32 0.0, %v604
    %v606 = vpop.f32.mrb[0].mxu0
    %607 = vmatprep.mubr.bf16.mxu0 0
    %608 = vmatmul.mubr.bf16.gmra.mrb[0].mxu0 %v510
    %v609 = vpop.f32.mrb[0].mxu0
    %v610 = vadd.f32 0.0, %v609
    %v611 = vpop.f32.mrb[0].mxu0
    %v612 = vpop.f32.mrb[0].mxu0
    %v613 = vadd.f32 0.0, %v612
    %v614 = vpop.f32.mrb[0].mxu0
    %615 = vdwg.mxu0
    %v616 = vld [vmem:[#allocation10] sm:$0xf]
    %v617 = vld [vmem:[#allocation10 + $0x4] sm:$0xf]
    %v618 = vld [vmem:[#allocation10 + $0x8] sm:$0xf]
    %v619 = vld [vmem:[#allocation10 + $0xc] sm:$0xf]
    %v620 = vld [vmem:[#allocation10 + $0x10] sm:$0xf]
    %v621 = vld [vmem:[#allocation10 + $0x14] sm:$0xf]
    %v622 = vld [vmem:[#allocation10 + $0x18] sm:$0xf]
    %v623 = vld [vmem:[#allocation10 + $0x1c] sm:$0xf]
    %v624 = vld [vmem:[#allocation10 + $0x20] sm:$0xf]
    %v625 = vld [vmem:[#allocation10 + $0x24] sm:$0xf]
    %v626 = vld [vmem:[#allocation10 + $0x28] sm:$0xf]
    %v627 = vld [vmem:[#allocation10 + $0x2c] sm:$0xf]
    %v628 = vld [vmem:[#allocation10 + $0x30] sm:$0xf]
    %v629 = vld [vmem:[#allocation10 + $0x34] sm:$0xf]
    %v630 = vld [vmem:[#allocation10 + $0x38] sm:$0xf]
    %v631 = vld [vmem:[#allocation10 + $0x3c] sm:$0xf]
    %v632 = vpack.c.bf16 %v557, %v554
    %v633 = vpack.c.bf16 %v565, %v562
    %v634 = vpack.c.bf16 %v573, %v570
    %v635 = vpack.c.bf16 %v581, %v578
    %v636 = vpack.c.bf16 %v589, %v586
    %v637 = vpack.c.bf16 %v597, %v594
    %v638 = vpack.c.bf16 %v605, %v602
    %v639 = vpack.c.bf16 %v613, %v610
    %640 = vmatprep.subr.bf16.mxu0 0
    %641 = vmatpush1.bf16.msra.mxu0 %v632
    %642 = vmatprep.subr.bf16.mxu0 0
    %643 = vmatpush1.bf16.msra.mxu0 %v633
    %644 = vmatprep.subr.bf16.mxu0 0
    %645 = vmatpush1.bf16.msra.mxu0 %v634
    %646 = vmatprep.subr.bf16.mxu0 0
    %647 = vmatpush1.bf16.msra.mxu0 %v635
    %648 = vmatprep.subr.bf16.mxu0 0
    %649 = vmatpush1.bf16.msra.mxu0 %v636
    %650 = vmatprep.subr.bf16.mxu0 0
    %651 = vmatpush1.bf16.msra.mxu0 %v637
    %652 = vmatprep.subr.bf16.mxu0 0
    %653 = vmatpush1.bf16.msra.mxu0 %v638
    %654 = vmatprep.subr.bf16.mxu0 0
    %655 = vmatpush1.bf16.msra.mxu0 %v639
    %656 = vmatprep.subr.bf16.mxu0 0
    %657 = vmatpush1.bf16.msra.mxu0 0
    %658 = vmatprep.subr.bf16.mxu0 0
    %659 = vmatpush1.bf16.msra.mxu0 0
    %660 = vmatprep.subr.bf16.mxu0 0
    %661 = vmatpush1.bf16.msra.mxu0 0
    %662 = vmatprep.subr.bf16.mxu0 0
    %663 = vmatpush1.bf16.msra.mxu0 0
    %664 = vmatprep.subr.bf16.mxu0 0
    %665 = vmatpush1.bf16.msra.mxu0 0
    %666 = vmatprep.subr.bf16.mxu0 0
    %667 = vmatpush1.bf16.msra.mxu0 0
    %668 = vmatprep.subr.bf16.mxu0 0
    %669 = vmatpush1.bf16.msra.mxu0 0
    %670 = vmatprep.subr.bf16.mxu0 0
    %671 = vmatpush1.bf16.msra.mxu0 0
    %672 = vmatprep.mubr.bf16.mxu0 0
    %673 = vmatmul.mubr.bf16.gmra.mrb[0].mxu0 %v197
    %v674 = vpop.f32.mrb[0].mxu0
    %v675 = vadd.f32 0.0, %v674
    %v676 = vpop.f32.mrb[0].mxu0
    %v677 = vpop.f32.mrb[0].mxu0
    %v678 = vadd.f32 0.0, %v677
    %v679 = vpop.f32.mrb[0].mxu0
    %680 = vmatprep.mubr.bf16.mxu0 0
    %681 = vmatmul.mubr.bf16.gmra.mrb[0].mxu0 %v198
    %v682 = vpop.f32.mrb[0].mxu0
    %v683 = vadd.f32 0.0, %v682
    %v684 = vpop.f32.mrb[0].mxu0
    %v685 = vpop.f32.mrb[0].mxu0
    %v686 = vadd.f32 0.0, %v685
    %v687 = vpop.f32.mrb[0].mxu0
    %688 = vmatprep.mubr.bf16.mxu0 0
    %689 = vmatmul.mubr.bf16.gmra.mrb[0].mxu0 %v199
    %v690 = vpop.f32.mrb[0].mxu0
    %v691 = vadd.f32 0.0, %v690
    %v692 = vpop.f32.mrb[0].mxu0
    %v693 = vpop.f32.mrb[0].mxu0
    %v694 = vadd.f32 0.0, %v693
    %v695 = vpop.f32.mrb[0].mxu0
    %696 = vmatprep.mubr.bf16.mxu0 0
    %697 = vmatmul.mubr.bf16.gmra.mrb[0].mxu0 %v200
    %v698 = vpop.f32.mrb[0].mxu0
    %v699 = vadd.f32 0.0, %v698
    %v700 = vpop.f32.mrb[0].mxu0
    %v701 = vpop.f32.mrb[0].mxu0
    %v702 = vadd.f32 0.0, %v701
    %v703 = vpop.f32.mrb[0].mxu0
    %704 = vmatprep.mubr.bf16.mxu0 0
    %705 = vmatmul.mubr.bf16.gmra.mrb[0].mxu0 %v201
    %v706 = vpop.f32.mrb[0].mxu0
    %v707 = vadd.f32 0.0, %v706
    %v708 = vpop.f32.mrb[0].mxu0
    %v709 = vpop.f32.mrb[0].mxu0
    %v710 = vadd.f32 0.0, %v709
    %v711 = vpop.f32.mrb[0].mxu0
    %712 = vmatprep.mubr.bf16.mxu0 0
    %713 = vmatmul.mubr.bf16.gmra.mrb[0].mxu0 %v202
    %v714 = vpop.f32.mrb[0].mxu0
    %v715 = vadd.f32 0.0, %v714
    %v716 = vpop.f32.mrb[0].mxu0
    %v717 = vpop.f32.mrb[0].mxu0
    %v718 = vadd.f32 0.0, %v717
    %v719 = vpop.f32.mrb[0].mxu0
    %720 = vmatprep.mubr.bf16.mxu0 0
    %721 = vmatmul.mubr.bf16.gmra.mrb[0].mxu0 %v203
    %v722 = vpop.f32.mrb[0].mxu0
    %v723 = vadd.f32 0.0, %v722
    %v724 = vpop.f32.mrb[0].mxu0
    %v725 = vpop.f32.mrb[0].mxu0
    %v726 = vadd.f32 0.0, %v725
    %v727 = vpop.f32.mrb[0].mxu0
    %728 = vmatprep.mubr.bf16.mxu0 0
    %729 = vmatmul.mubr.bf16.gmra.mrb[0].mxu0 %v204
    %v730 = vpop.f32.mrb[0].mxu0
    %v731 = vadd.f32 0.0, %v730
    %v732 = vpop.f32.mrb[0].mxu0
    %v733 = vpop.f32.mrb[0].mxu0
    %v734 = vadd.f32 0.0, %v733
    %v735 = vpop.f32.mrb[0].mxu0
    %736 = vdwg.mxu0
    %737 = vst [vmem:[#allocation12] sm:$0xff] %v675
    %738 = vst [vmem:[#allocation12 + $0x8] sm:$0xff] %v678
    %739 = vst [vmem:[#allocation12 + $0x10] sm:$0xff] %v683
    %740 = vst [vmem:[#allocation12 + $0x18] sm:$0xff] %v686
    %741 = vst [vmem:[#allocation12 + $0x20] sm:$0xff] %v691
    %742 = vst [vmem:[#allocation12 + $0x28] sm:$0xff] %v694
    %743 = vst [vmem:[#allocation12 + $0x30] sm:$0xff] %v699
    %744 = vst [vmem:[#allocation12 + $0x38] sm:$0xff] %v702
    %745 = vst [vmem:[#allocation12 + $0x40] sm:$0xff] %v707
    %746 = vst [vmem:[#allocation12 + $0x48] sm:$0xff] %v710
    %747 = vst [vmem:[#allocation12 + $0x50] sm:$0xff] %v715
    %748 = vst [vmem:[#allocation12 + $0x58] sm:$0xff] %v718
    %749 = vst [vmem:[#allocation12 + $0x60] sm:$0xff] %v723
    %750 = vst [vmem:[#allocation12 + $0x68] sm:$0xff] %v726
    %751 = vst [vmem:[#allocation12 + $0x70] sm:$0xff] %v731
    %752 = vst [vmem:[#allocation12 + $0x78] sm:$0xff] %v734
    %v753 = vpack.c.bf16 %v678, %v675
    %v754 = vpack.c.bf16 %v686, %v683
    %v755 = vpack.c.bf16 %v694, %v691
    %v756 = vpack.c.bf16 %v702, %v699
    %v757 = vpack.c.bf16 %v710, %v707
    %v758 = vpack.c.bf16 %v718, %v715
    %v759 = vpack.c.bf16 %v726, %v723
    %v760 = vpack.c.bf16 %v734, %v731
    %v777 = vunpack.c.l.b16 %v616
    %v778 = vunpack.c.l.b16 %v617
    %v779 = vunpack.c.l.b16 %v618
    %v780 = vunpack.c.l.b16 %v619
    %v781 = vunpack.c.l.b16 %v620
    %v782 = vunpack.c.l.b16 %v621
    %v783 = vunpack.c.l.b16 %v622
    %v784 = vunpack.c.l.b16 %v623
    %v785 = vunpack.c.l.b16 %v624
    %v786 = vunpack.c.l.b16 %v625
    %v787 = vunpack.c.l.b16 %v626
    %v788 = vunpack.c.l.b16 %v627
    %v789 = vunpack.c.l.b16 %v628
    %v790 = vunpack.c.l.b16 %v629
    %v791 = vunpack.c.l.b16 %v630
    %v792 = vunpack.c.l.b16 %v631
    %v793 = vpack.c.b16 %v778, %v777
    %v794 = vpack.c.b16 %v780, %v779
    %v795 = vpack.c.b16 %v782, %v781
    %v796 = vpack.c.b16 %v784, %v783
    %v797 = vpack.c.b16 %v786, %v785
    %v798 = vpack.c.b16 %v788, %v787
    %v799 = vpack.c.b16 %v790, %v789
    %v800 = vpack.c.b16 %v792, %v791
    %809 = vmatprep.subr.bf16.mxu0 0
    %810 = vmatpush1.bf16.msra.mxu0 %v793
    %811 = vmatprep.subr.bf16.mxu0 0
    %812 = vmatpush1.bf16.msra.mxu0 %v794
    %813 = vmatprep.subr.bf16.mxu0 0
    %814 = vmatpush1.bf16.msra.mxu0 %v795
    %815 = vmatprep.subr.bf16.mxu0 0
    %816 = vmatpush1.bf16.msra.mxu0 %v796
    %817 = vmatprep.subr.bf16.mxu0 0
    %818 = vmatpush1.bf16.msra.mxu0 %v797
    %819 = vmatprep.subr.bf16.mxu0 0
    %820 = vmatpush1.bf16.msra.mxu0 %v798
    %821 = vmatprep.subr.bf16.mxu0 0
    %822 = vmatpush1.bf16.msra.mxu0 %v799
    %823 = vmatprep.subr.bf16.mxu0 0
    %824 = vmatpush1.bf16.msra.mxu0 %v800
    %825 = vmatprep.subr.bf16.mxu0 0
    %826 = vmatpush1.bf16.msra.mxu0 0
    %827 = vmatprep.subr.bf16.mxu0 0
    %828 = vmatpush1.bf16.msra.mxu0 0
    %829 = vmatprep.subr.bf16.mxu0 0
    %830 = vmatpush1.bf16.msra.mxu0 0
    %831 = vmatprep.subr.bf16.mxu0 0
    %832 = vmatpush1.bf16.msra.mxu0 0
    %833 = vmatprep.subr.bf16.mxu0 0
    %834 = vmatpush1.bf16.msra.mxu0 0
    %835 = vmatprep.subr.bf16.mxu0 0
    %836 = vmatpush1.bf16.msra.mxu0 0
    %837 = vmatprep.subr.bf16.mxu0 0
    %838 = vmatpush1.bf16.msra.mxu0 0
    %839 = vmatprep.subr.bf16.mxu0 0
    %840 = vmatpush1.bf16.msra.mxu0 0
    %841 = vmatprep.mubr.bf16.mxu0 0
    %842 = vmatmul.mubr.bf16.gmra.mrb[0].mxu0 %v753
    %v843 = vpop.f32.mrb[0].mxu0
    %v844 = vadd.f32 0.0, %v843
    %v845 = vpop.f32.mrb[0].mxu0
    %v846 = vpop.f32.mrb[0].mxu0
    %v847 = vadd.f32 0.0, %v846
    %v848 = vpop.f32.mrb[0].mxu0
    %849 = vmatprep.mubr.bf16.mxu0 0
    %850 = vmatmul.mubr.bf16.gmra.mrb[0].mxu0 %v754
    %v851 = vpop.f32.mrb[0].mxu0
    %v852 = vadd.f32 0.0, %v851
    %v853 = vpop.f32.mrb[0].mxu0
    %v854 = vpop.f32.mrb[0].mxu0
    %v855 = vadd.f32 0.0, %v854
    %v856 = vpop.f32.mrb[0].mxu0
    %857 = vmatprep.mubr.bf16.mxu0 0
    %858 = vmatmul.mubr.bf16.gmra.mrb[0].mxu0 %v755
    %v859 = vpop.f32.mrb[0].mxu0
    %v860 = vadd.f32 0.0, %v859
    %v861 = vpop.f32.mrb[0].mxu0
    %v862 = vpop.f32.mrb[0].mxu0
    %v863 = vadd.f32 0.0, %v862
    %v864 = vpop.f32.mrb[0].mxu0
    %865 = vmatprep.mubr.bf16.mxu0 0
    %866 = vmatmul.mubr.bf16.gmra.mrb[0].mxu0 %v756
    %v867 = vpop.f32.mrb[0].mxu0
    %v868 = vadd.f32 0.0, %v867
    %v869 = vpop.f32.mrb[0].mxu0
    %v870 = vpop.f32.mrb[0].mxu0
    %v871 = vadd.f32 0.0, %v870
    %v872 = vpop.f32.mrb[0].mxu0
    %873 = vmatprep.mubr.bf16.mxu0 0
    %874 = vmatmul.mubr.bf16.gmra.mrb[0].mxu0 %v757
    %v875 = vpop.f32.mrb[0].mxu0
    %v876 = vadd.f32 0.0, %v875
    %v877 = vpop.f32.mrb[0].mxu0
    %v878 = vpop.f32.mrb[0].mxu0
    %v879 = vadd.f32 0.0, %v878
    %v880 = vpop.f32.mrb[0].mxu0
    %881 = vmatprep.mubr.bf16.mxu0 0
    %882 = vmatmul.mubr.bf16.gmra.mrb[0].mxu0 %v758
    %v883 = vpop.f32.mrb[0].mxu0
    %v884 = vadd.f32 0.0, %v883
    %v885 = vpop.f32.mrb[0].mxu0
    %v886 = vpop.f32.mrb[0].mxu0
    %v887 = vadd.f32 0.0, %v886
    %v888 = vpop.f32.mrb[0].mxu0
    %889 = vmatprep.mubr.bf16.mxu0 0
    %890 = vmatmul.mubr.bf16.gmra.mrb[0].mxu0 %v759
    %v891 = vpop.f32.mrb[0].mxu0
    %v892 = vadd.f32 0.0, %v891
    %v893 = vpop.f32.mrb[0].mxu0
    %v894 = vpop.f32.mrb[0].mxu0
    %v895 = vadd.f32 0.0, %v894
    %v896 = vpop.f32.mrb[0].mxu0
    %897 = vmatprep.mubr.bf16.mxu0 0
    %898 = vmatmul.mubr.bf16.gmra.mrb[0].mxu0 %v760
    %v899 = vpop.f32.mrb[0].mxu0
    %v900 = vadd.f32 0.0, %v899
    %v901 = vpop.f32.mrb[0].mxu0
    %v902 = vpop.f32.mrb[0].mxu0
    %v903 = vadd.f32 0.0, %v902
    %v904 = vpop.f32.mrb[0].mxu0
    %905 = vdwg.mxu0
    %v906 = vpack.c.bf16 %v847, %v844
    %v907 = vpack.c.bf16 %v855, %v852
    %v908 = vpack.c.bf16 %v863, %v860
    %v909 = vpack.c.bf16 %v871, %v868
    %v910 = vpack.c.bf16 %v879, %v876
    %v911 = vpack.c.bf16 %v887, %v884
    %v912 = vpack.c.bf16 %v895, %v892
    %v913 = vpack.c.bf16 %v903, %v900
    %914 = vmatprep.subr.bf16.mxu0 0
    %915 = vmatpush1.bf16.msra.mxu0 %v906
    %916 = vmatprep.subr.bf16.mxu0 0
    %917 = vmatpush1.bf16.msra.mxu0 %v907
    %918 = vmatprep.subr.bf16.mxu0 0
    %919 = vmatpush1.bf16.msra.mxu0 %v908
    %920 = vmatprep.subr.bf16.mxu0 0
    %921 = vmatpush1.bf16.msra.mxu0 %v909
    %922 = vmatprep.subr.bf16.mxu0 0
    %923 = vmatpush1.bf16.msra.mxu0 %v910
    %924 = vmatprep.subr.bf16.mxu0 0
    %925 = vmatpush1.bf16.msra.mxu0 %v911
    %926 = vmatprep.subr.bf16.mxu0 0
    %927 = vmatpush1.bf16.msra.mxu0 %v912
    %928 = vmatprep.subr.bf16.mxu0 0
    %929 = vmatpush1.bf16.msra.mxu0 %v913
    %930 = vmatprep.subr.bf16.mxu0 0
    %931 = vmatpush1.bf16.msra.mxu0 0
    %932 = vmatprep.subr.bf16.mxu0 0
    %933 = vmatpush1.bf16.msra.mxu0 0
    %934 = vmatprep.subr.bf16.mxu0 0
    %935 = vmatpush1.bf16.msra.mxu0 0
    %936 = vmatprep.subr.bf16.mxu0 0
    %937 = vmatpush1.bf16.msra.mxu0 0
    %938 = vmatprep.subr.bf16.mxu0 0
    %939 = vmatpush1.bf16.msra.mxu0 0
    %940 = vmatprep.subr.bf16.mxu0 0
    %941 = vmatpush1.bf16.msra.mxu0 0
    %942 = vmatprep.subr.bf16.mxu0 0
    %943 = vmatpush1.bf16.msra.mxu0 0
    %944 = vmatprep.subr.bf16.mxu0 0
    %945 = vmatpush1.bf16.msra.mxu0 0
    %946 = vmatprep.mubr.bf16.mxu0 0
    %947 = vmatmul.mubr.bf16.gmra.mrb[0].mxu0 %v503
    %v948 = vpop.f32.mrb[0].mxu0
    %v949 = vadd.f32 0.0, %v948
    %v950 = vpop.f32.mrb[0].mxu0
    %v951 = vpop.f32.mrb[0].mxu0
    %v952 = vadd.f32 0.0, %v951
    %v953 = vpop.f32.mrb[0].mxu0
    %954 = vmatprep.mubr.bf16.mxu0 0
    %955 = vmatmul.mubr.bf16.gmra.mrb[0].mxu0 %v504
    %v956 = vpop.f32.mrb[0].mxu0
    %v957 = vadd.f32 0.0, %v956
    %v958 = vpop.f32.mrb[0].mxu0
    %v959 = vpop.f32.mrb[0].mxu0
    %v960 = vadd.f32 0.0, %v959
    %v961 = vpop.f32.mrb[0].mxu0
    %962 = vmatprep.mubr.bf16.mxu0 0
    %963 = vmatmul.mubr.bf16.gmra.mrb[0].mxu0 %v505
    %v964 = vpop.f32.mrb[0].mxu0
    %v965 = vadd.f32 0.0, %v964
    %v966 = vpop.f32.mrb[0].mxu0
    %v967 = vpop.f32.mrb[0].mxu0
    %v968 = vadd.f32 0.0, %v967
    %v969 = vpop.f32.mrb[0].mxu0
    %970 = vmatprep.mubr.bf16.mxu0 0
    %971 = vmatmul.mubr.bf16.gmra.mrb[0].mxu0 %v506
    %v972 = vpop.f32.mrb[0].mxu0
    %v973 = vadd.f32 0.0, %v972
    %v974 = vpop.f32.mrb[0].mxu0
    %v975 = vpop.f32.mrb[0].mxu0
    %v976 = vadd.f32 0.0, %v975
    %v977 = vpop.f32.mrb[0].mxu0
    %978 = vmatprep.mubr.bf16.mxu0 0
    %979 = vmatmul.mubr.bf16.gmra.mrb[0].mxu0 %v507
    %v980 = vpop.f32.mrb[0].mxu0
    %v981 = vadd.f32 0.0, %v980
    %v982 = vpop.f32.mrb[0].mxu0
    %v983 = vpop.f32.mrb[0].mxu0
    %v984 = vadd.f32 0.0, %v983
    %v985 = vpop.f32.mrb[0].mxu0
    %986 = vmatprep.mubr.bf16.mxu0 0
    %987 = vmatmul.mubr.bf16.gmra.mrb[0].mxu0 %v508
    %v988 = vpop.f32.mrb[0].mxu0
    %v989 = vadd.f32 0.0, %v988
    %v990 = vpop.f32.mrb[0].mxu0
    %v991 = vpop.f32.mrb[0].mxu0
    %v992 = vadd.f32 0.0, %v991
    %v993 = vpop.f32.mrb[0].mxu0
    %994 = vmatprep.mubr.bf16.mxu0 0
    %995 = vmatmul.mubr.bf16.gmra.mrb[0].mxu0 %v509
    %v996 = vpop.f32.mrb[0].mxu0
    %v997 = vadd.f32 0.0, %v996
    %v998 = vpop.f32.mrb[0].mxu0
    %v999 = vpop.f32.mrb[0].mxu0
    %v1000 = vadd.f32 0.0, %v999
    %v1001 = vpop.f32.mrb[0].mxu0
    %1002 = vmatprep.mubr.bf16.mxu0 0
    %1003 = vmatmul.mubr.bf16.gmra.mrb[0].mxu0 %v510
    %v1004 = vpop.f32.mrb[0].mxu0
    %v1005 = vadd.f32 0.0, %v1004
    %v1006 = vpop.f32.mrb[0].mxu0
    %v1007 = vpop.f32.mrb[0].mxu0
    %v1008 = vadd.f32 0.0, %v1007
    %v1009 = vpop.f32.mrb[0].mxu0
    %1010 = vdwg.mxu0
    %1011 = vst [vmem:[#allocation11] sm:$0xff] %v949
    %1012 = vst [vmem:[#allocation11 + $0x8] sm:$0xff] %v952
    %1013 = vst [vmem:[#allocation11 + $0x10] sm:$0xff] %v957
    %1014 = vst [vmem:[#allocation11 + $0x18] sm:$0xff] %v960
    %1015 = vst [vmem:[#allocation11 + $0x20] sm:$0xff] %v965
    %1016 = vst [vmem:[#allocation11 + $0x28] sm:$0xff] %v968
    %1017 = vst [vmem:[#allocation11 + $0x30] sm:$0xff] %v973
    %1018 = vst [vmem:[#allocation11 + $0x38] sm:$0xff] %v976
    %1019 = vst [vmem:[#allocation11 + $0x40] sm:$0xff] %v981
    %1020 = vst [vmem:[#allocation11 + $0x48] sm:$0xff] %v984
    %1021 = vst [vmem:[#allocation11 + $0x50] sm:$0xff] %v989
    %1022 = vst [vmem:[#allocation11 + $0x58] sm:$0xff] %v992
    %1023 = vst [vmem:[#allocation11 + $0x60] sm:$0xff] %v997
    %1024 = vst [vmem:[#allocation11 + $0x68] sm:$0xff] %v1000
    %1025 = vst [vmem:[#allocation11 + $0x70] sm:$0xff] %v1005
    %1026 = vst [vmem:[#allocation11 + $0x78] sm:$0xff] %v1008
    // Predicated region
    $region42: #{tpu_custom_call.1} parent=1 // pred_check
      _
    $region43: #{tpu_custom_call.1} parent=1 // pred_check_branch
      %1028 = sbr.rel (0) target = $region45
    $region44: #{tpu_custom_call.1} parent=1 // pred_region
      %s1030 = ssub.s32 2048, 2048
      %1031 = vsyncadd [#allocation4], %s1030
      %s1032 = sshll.u32 [#allocation11], 4
      %s1033 = int_to_ptr.vmem [resolvable:$true] %s1032
      %1038 = dma.vmem_to_hbm [thread:$0]  %s1033, 2048, %s5, [#allocation4], 128, 128, 8
    $region45: #{tpu_custom_call.1} parent=1 // pred_fallthru
      _
    // Predicated region
    $region46: #{tpu_custom_call.1} parent=1 // pred_check
      _
    $region47: #{tpu_custom_call.1} parent=1 // pred_check_branch
      %1040 = sbr.rel (0) target = $region49
    $region48: #{tpu_custom_call.1} parent=1 // pred_region
      %s1042 = ssub.s32 2048, 2048
      %1043 = vsyncadd [#allocation13], %s1042
      %s1044 = sshll.u32 [#allocation12], 4
      %s1045 = int_to_ptr.vmem [resolvable:$true] %s1044
      %1050 = dma.vmem_to_hbm [thread:$0]  %s1045, 2048, %s6, [#allocation13], 128, 128, 8
    $region49: #{tpu_custom_call.1} parent=1 // pred_fallthru
      _
    // Predicated region
    $region50: #{tpu_custom_call.1} parent=1 // pred_check
      _
    $region51: #{tpu_custom_call.1} parent=1 // pred_check_branch
      %1052 = sbr.rel (0) target = $region53
    $region52: #{tpu_custom_call.1} parent=1 // pred_region
      %1053 = dma.done [#allocation4], 2048
    $region53: #{tpu_custom_call.1} parent=1 // pred_fallthru
      _
    // Predicated region
    $region54: #{tpu_custom_call.1} parent=1 // pred_check
      _
    $region55: #{tpu_custom_call.1} parent=1 // pred_check_branch
      %1055 = sbr.rel (0) target = $region57
    $region56: #{tpu_custom_call.1} parent=1 // pred_region
      %1056 = dma.done [#allocation13], 2048
    $region57: #{tpu_custom_call.1} parent=1 // pred_fallthru
      _
    %1057 = vsyncpa [#allocation3], 1
    %1058 = vsyncpa [#allocation6], 1
    %1059 = vsyncpa [#allocation9], 1
    %1060 = vsyncpa [#allocation4], 1
    %1061 = vsyncpa [#allocation13], 1

</llo_original>
